<compile_context>
chip_gen: v7x
topology: tpu7x:2x2x1
jax: 0.10.0
libtpu: 0.0.40
codegen_flags: <defaults>
</compile_context>

<pallas_src>
import functools
import math

import jax
import jax.numpy as jnp
from jax.experimental import pallas as pl
from jax.experimental.pallas import tpu as pltpu


_NEG = -1e30  # additive mask value for invalid / padded edges (avoid -inf in bf16 paths)


def _round_up(a, b):
    return (a + b - 1) // b * b


def _choose_tiling(M, block_m):
    """Centers live on the 128-lane axis; keep v7x's two TensorCores balanced."""
    block_m = max(128, _round_up(int(block_m), 128))
    m128 = _round_up(max(int(M), 1), 128)
    block_m = min(block_m, m128)
    nb = -(-m128 // block_m)
    if nb == 1 and m128 >= 256:
        # split so both TensorCores (v7x megacore) get work on the parallel axis
        block_m = _round_up(m128 // 2, 128)
        nb = -(-m128 // block_m)
    if nb > 1 and nb % 2 == 1:
        nb += 1  # even step count avoids the 1-vs-2 step tail bubble on v7x
    return block_m, nb * block_m, nb


# ----------------------------- Pallas kernel -------------------------------
def _sa_conv_kernel(msg_ref, maskadd_ref, w1bd_ref, w2bd_ref, b2_ref, out_ref):
    # msg_ref     : (KG, G*Fin_p, BM) bf16  G neighbor slots per group, 1.0 bias row folded in
    # maskadd_ref : (KG, G, BM)       bf16  0.0 for a valid edge, -1e30 for padding
    # w1bd_ref    : (G*H, G*Fin_p)    bf16  block-diagonal W1^T with b1 folded into the bias col
    # w2bd_ref    : (G*Fout, G*H)     bf16  block-diagonal W2^T
    # b2_ref      : (Fout, 1)         f32
    # out_ref     : (Fout, BM)        f32
    KG = msg_ref.shape[0]
    G = maskadd_ref.shape[1]
    Fout = out_ref.shape[0]

    w1bd = w1bd_ref[...]
    w2bd = w2bd_ref[...]

    def one_group(kg, acc):
        slab = msg_ref[kg]                                             # (G*Fin_p, BM) bf16
        h = jnp.dot(w1bd, slab, preferred_element_type=jnp.float32)    # (G*H, BM) f32, b1 folded
        h = jnp.maximum(h, 0.0).astype(w2bd.dtype)                     # ReLU -> bf16 for MXU
        o = jnp.dot(w2bd, h, preferred_element_type=jnp.float32)       # (G*Fout, BM) f32
        m = maskadd_ref[kg].astype(jnp.float32)                        # (G, BM), add in f32
        best = o[0:Fout, :] + m[0:1, :]
        for g in range(1, G):                                          # static unroll over G
            best = jnp.maximum(best, o[g * Fout:(g + 1) * Fout, :] + m[g:g + 1, :])
        return jnp.maximum(acc, best)                                  # running max over groups

    acc0 = jnp.full(out_ref.shape, _NEG, dtype=jnp.float32)

    # 2x manual unroll: lets the scheduler overlap group k+1's MXU work with
    # group k's VPU epilogue without relying on fori_loop's unroll kwarg.
    U = 2 if KG % 2 == 0 else 1

    def body(i, acc):
        base = i * U
        for u in range(U):
            acc = one_group(base + u, acc)
        return acc

    acc = jax.lax.fori_loop(0, KG // U, body, acc0)

    # Second bias + ReLU hoisted out of the per-edge path:
    #   max_k relu(h_k + b2) == relu(max_k h_k + b2)
    # and relu(-1e30 + b2) == 0 reproduces the scatter-max default for centers
    # with no valid neighbors, so no has_any / where epilogue is needed.
    out_ref[...] = jnp.maximum(acc + b2_ref[...], 0.0)


def pointnet_conv_pallas(x, pos, nbr_idx, mask, pos_c, w1, b1, w2, b2, *,
                         block_m=256, group=4):
    """out[m] = max over valid j of relu(W2 relu(W1 [x_j, pos_j - pos_m] + b1) + b2), else 0."""
    M, K = nbr_idx.shape
    C = x.shape[1]
    Fin = C + 3
    H = w1.shape[1]
    Fout = w2.shape[1]
    G = max(1, int(group))

    # ---- tiling ----
    block_m, M_pad, nb = _choose_tiling(M, block_m)
    K_pad = _round_up(K, G)
    KG = K_pad // G
    Fin_p = _round_up(Fin + 1, 8)          # +1 row of ones (the folded b1 slot)
    GF = G * Fin_p

    # ---- pad the tiny index/mask arrays, not the dense gathered tensor ----
    nbr_idx_p = jnp.pad(nbr_idx.astype(jnp.int32), ((0, M_pad - M), (0, K_pad - K)))
    mask_p = jnp.pad(mask.astype(jnp.float32), ((0, M_pad - M), (0, K_pad - K)))
    pos_c_p = jnp.pad(pos_c.astype(jnp.float32), ((0, M_pad - M), (0, 0)))

    # ---- gather straight into the lane-dense blocked layout (bf16) ----
    # TODO(synk): longer term, gather x/pos inside the kernel via scalar-prefetched
    #             nbr_idx (pl.Element / manual DMA) instead of materializing this.
    x_j = x[nbr_idx_p].astype(jnp.bfloat16)                            # [M_pad, K_pad, C]
    rel = (pos[nbr_idx_p] - pos_c_p[:, None, :]).astype(jnp.bfloat16)  # [M_pad, K_pad, 3]
    ones = jnp.ones((M_pad, K_pad, 1), jnp.bfloat16)                   # bias row (b1 folded)
    zpad = jnp.zeros((M_pad, K_pad, Fin_p - Fin - 1), jnp.bfloat16)
    feat = jnp.concatenate([x_j, rel, ones, zpad], axis=-1)            # [M_pad, K_pad, Fin_p]
    msg_b = (feat.reshape(nb, block_m, KG, G, Fin_p)
                 .transpose(0, 2, 3, 4, 1)
                 .reshape(nb, KG, GF, block_m))                        # contiguous per grid step

    maskadd = jnp.where(mask_p > 0.5, 0.0, _NEG).astype(jnp.bfloat16)  # [M_pad, K_pad]
    maskadd_b = (maskadd.reshape(nb, block_m, KG, G)
                        .transpose(0, 2, 3, 1))                        # [nb, KG, G, block_m]

    # ---- block-diagonal weights, b1 folded into the bias column ----
    w1aug = jnp.zeros((H, Fin_p), jnp.float32)
    w1aug = w1aug.at[:, :Fin].set(w1.T.astype(jnp.float32))
    w1aug = w1aug.at[:, Fin].set(b1.reshape(-1).astype(jnp.float32))
    eye_g = jnp.eye(G, dtype=jnp.float32)
    w1bd = jnp.kron(eye_g, w1aug).astype(jnp.bfloat16)                 # (G*H, G*Fin_p)
    w2bd = jnp.kron(eye_g, w2.T.astype(jnp.float32)).astype(jnp.bfloat16)  # (G*Fout, G*H)
    b2c = b2.reshape(Fout, 1).astype(jnp.float32)

    cost = pl.CostEstimate(
        flops=2 * M_pad * KG * (G * H * GF + G * Fout * G * H),
        transcendentals=0,
        bytes_accessed=(msg_b.size * 2 + maskadd_b.size * 2
                        + w1bd.size * 2 + w2bd.size * 2
                        + Fout * 4 + M_pad * Fout * 4),
    )

    out_t = pl.pallas_call(
        _sa_conv_kernel,
        out_shape=jax.ShapeDtypeStruct((Fout, M_pad), jnp.float32),
        grid_spec=pltpu.PrefetchScalarGridSpec(
            num_scalar_prefetch=0,
            grid=(nb,),
            in_specs=[
                pl.BlockSpec((None, KG, GF, block_m), lambda i: (i, 0, 0, 0)),
                pl.BlockSpec((None, KG, G, block_m), lambda i: (i, 0, 0, 0)),
                pl.BlockSpec((G * H, GF), lambda i: (0, 0)),
                pl.BlockSpec((G * Fout, G * H), lambda i: (0, 0)),
                pl.BlockSpec((Fout, 1), lambda i: (0, 0)),
            ],
            out_specs=pl.BlockSpec((Fout, block_m), lambda i: (0, i)),
        ),
        compiler_params=pltpu.CompilerParams(dimension_semantics=("parallel",)),
        cost_estimate=cost,
    )(msg_b, maskadd_b, w1bd, w2bd, b2c)

    return out_t[:, :M].T                                              # [M, Fout]


# ----------------------- pure-JAX reference (f32) ---------------------------
def _pointnet_conv_reference(x, pos, nbr_idx, mask, pos_c, w1, b1, w2, b2):
    x_j = x[nbr_idx]
    rel = pos[nbr_idx] - pos_c[:, None, :]
    msg = jnp.concatenate([x_j, rel], axis=-1).astype(jnp.float32)     # [M, K, Fin]
    h = jnp.maximum(msg @ w1 + b1.reshape(1, 1, -1), 0.0)
    h = jnp.maximum(h @ w2 + b2.reshape(1, 1, -1), 0.0)
    h = jnp.where(mask[..., None] > 0.5, h, -jnp.inf)
    mx = jnp.max(h, axis=1)
    return jnp.where(jnp.isfinite(mx), mx, 0.0)


# ------------------------------ JAX glue ------------------------------------
def _fps_single(pos_b, n_sample):
    # Farthest point sampling on one cloud [N, 3].
    # TODO(synk): PyG fps uses a random start point; we start at index 0.
    N = pos_b.shape[0]

    def body(i, state):
        idx, mind = state
        last = pos_b[idx[i - 1]]
        d = jnp.sum((pos_b - last) ** 2, axis=-1)
        mind = jnp.minimum(mind, d)
        idx = idx.at[i].set(jnp.argmax(mind).astype(jnp.int32))
        return idx, mind

    idx0 = jnp.zeros((n_sample,), jnp.int32)
    mind0 = jnp.full((N,), jnp.inf, jnp.float32)
    idx, _ = jax.lax.fori_loop(1, n_sample, body, (idx0, mind0))
    return idx


def _build_neighborhoods(pos, batch, idx, r, K):
    """radius(pos, pos[idx], r, batch, batch[idx], max_num_neighbors=K) as dense idx/mask."""
    pos_c = pos[idx]
    batch_c = batch[idx]
    Ntot = pos.shape[0]
    d2 = jnp.sum((pos_c[:, None, :] - pos[None, :, :]) ** 2, axis=-1)   # [M, Ntot]
    valid = (batch_c[:, None] == batch[None, :]) & (d2 <= r * r)
    # TODO(synk): PyG keeps the first K neighbors found; we keep the K nearest.
    d2m = jnp.where(valid, d2, jnp.inf)
    order = jnp.argsort(d2m, axis=1)
    take = min(K, Ntot)
    nbr_idx = order[:, :take].astype(jnp.int32)
    nbr_valid = jnp.take_along_axis(valid, order[:, :take], axis=1)
    if take < K:
        pad = K - take
        nbr_idx = jnp.pad(nbr_idx, ((0, 0), (0, pad)))
        nbr_valid = jnp.pad(nbr_valid, ((0, 0), (0, pad)))
    mask = nbr_valid.astype(jnp.float32)                                # [M, K]
    return nbr_idx, mask, pos_c, batch_c


@functools.partial(jax.jit, static_argnames=("ratio", "r", "B", "N", "K",
                                              "block_m", "use_pallas"))
def sa_module_forward(x, pos, batch, params, *, ratio, r, B, N, K=64,
                      block_m=256, use_pallas=True):
    """Equivalent of SAModule.forward(x, pos, batch) -> (x_out, pos_out, batch_out)."""
    n_sample = int(math.ceil(ratio * N))

    # --- fps(pos, batch, ratio): clouds are contiguous blocks of N points ---
    pos_per = pos.reshape(B, N, 3)
    idx_local = jax.vmap(lambda p: _fps_single(p, n_sample))(pos_per)   # [B, n_sample]
    idx = (idx_local + (jnp.arange(B, dtype=jnp.int32) * N)[:, None]).reshape(-1)

    nbr_idx, mask, pos_c, batch_c = _build_neighborhoods(pos, batch, idx, r, K)

    w1, b1, w2, b2 = params
    if use_pallas:
        x_out = pointnet_conv_pallas(x, pos, nbr_idx, mask, pos_c,
                                     w1, b1, w2, b2, block_m=block_m)
    else:
        x_out = _pointnet_conv_reference(x, pos, nbr_idx, mask, pos_c,
                                         w1, b1, w2, b2)
    return x_out, pos_c, batch_c


# ------------------------------- main ---------------------------------------
if __name__ == "__main__":
    B, N, C = 2, 16, 4          # 2 clouds of 16 points, 4 input features
    ratio, r = 0.5, 0.5
    H, Fout = 32, 32            # nn = MLP([C+3, 32, 32]) with ReLU after each Linear
    K = 64                      # max_num_neighbors

    key = jax.random.PRNGKey(0)
    kx, kp, k1, k2, k3, k4 = jax.random.split(key, 6)

    Ntot = B * N
    x = jax.random.normal(kx, (Ntot, C), dtype=jnp.float32)
    pos = jax.random.uniform(kp, (Ntot, 3), dtype=jnp.float32)
    batch = jnp.repeat(jnp.arange(B, dtype=jnp.int32), N)

    Fin = C + 3
    w1 = jax.random.normal(k1, (Fin, H), dtype=jnp.float32) * (1.0 / math.sqrt(Fin))
    b1 = jax.random.normal(k2, (1, H), dtype=jnp.float32) * 0.01
    w2 = jax.random.normal(k3, (H, Fout), dtype=jnp.float32) * (1.0 / math.sqrt(H))
    b2 = jax.random.normal(k4, (1, Fout), dtype=jnp.float32) * 0.01
    params = (w1, b1, w2, b2)

    x_out, pos_out, batch_out = sa_module_forward(
        x, pos, batch, params, ratio=ratio, r=r, B=B, N=N, K=K, block_m=256
    )
    jax.block_until_ready((x_out, pos_out, batch_out))

    M = int(math.ceil(ratio * N)) * B
    assert x_out.shape == (M, Fout)
    assert pos_out.shape == (M, 3)
    assert batch_out.shape == (M,)

    # Loose check against the f32 reference (kernel matmuls run in bf16).
    x_ref, _, _ = sa_module_forward(
        x, pos, batch, params, ratio=ratio, r=r, B=B, N=N, K=K, use_pallas=False
    )
    max_err = float(jnp.max(jnp.abs(x_out - x_ref)))
    assert max_err < 0.25, f"mismatch vs f32 reference: {max_err}"

    print("KERNEL_OK")
</pallas_src>

<mosaic_0001>
module attributes {stable_mosaic.version = 11 : i64} {
  func.func @_sa_conv_kernel(%arg0: i32, %arg1: memref<1x16x32x128xbf16, #tpu.memory_space<vmem>>, %arg2: memref<1x16x4x128xbf16, #tpu.memory_space<vmem>>, %arg3: memref<128x32xbf16, #tpu.memory_space<vmem>>, %arg4: memref<128x128xbf16, #tpu.memory_space<vmem>>, %arg5: memref<32x1xf32, #tpu.memory_space<vmem>>, %arg6: memref<32x128xf32, #tpu.memory_space<vmem>>) attributes {dimension_semantics = [#tpu.dimension_semantics<parallel>], iteration_bounds = array<i64: 1>, scalar_prefetch = 0 : i64, scratch_operands = 0 : i64, tpu.core_type = #tpu.core_type<tc>, window_params = [{transform_indices = @transform_0, window_bounds = array<i64: 1, 16, 32, 128>}, {transform_indices = @transform_1, window_bounds = array<i64: 1, 16, 4, 128>}, {pipeline_mode = #tpu.pipeline_mode<synchronous>, transform_indices = @transform_2, window_bounds = array<i64: 128, 32>}, {pipeline_mode = #tpu.pipeline_mode<synchronous>, transform_indices = @transform_3, window_bounds = array<i64: 128, 128>}, {pipeline_mode = #tpu.pipeline_mode<synchronous>, transform_indices = @transform_4, window_bounds = array<i64: 32, 1>}, {transform_indices = @transform_5, window_bounds = array<i64: 32, 128>}]} {
    %c0 = arith.constant 0 : index
    %c0_0 = arith.constant 0 : index
    %0 = vector.load %arg3[%c0, %c0_0] : memref<128x32xbf16, #tpu.memory_space<vmem>>, vector<128x32xbf16>
    %c0_1 = arith.constant 0 : index
    %c0_2 = arith.constant 0 : index
    %1 = vector.load %arg4[%c0_1, %c0_2] : memref<128x128xbf16, #tpu.memory_space<vmem>>, vector<128x128xbf16>
    %cst = arith.constant -1.000000e+30 : f32
    %2 = vector.broadcast %cst : f32 to vector<32x128xf32>
    %c0_i32 = arith.constant 0 : i32
    %c8_i32 = arith.constant 8 : i32
    %3 = arith.addi %c0_i32, %c8_i32 : i32
    %c1_i32 = arith.constant 1 : i32
    %4 = scf.for %arg7 = %c0_i32 to %3 step %c1_i32 iter_args(%arg8 = %2) -> (vector<32x128xf32>)  : i32 {
      %c2_i32 = arith.constant 2 : i32
      %11 = arith.muli %arg7, %c2_i32 : i32
      %c0_i32_9 = arith.constant 0 : i32
      %12 = arith.addi %11, %c0_i32_9 : i32
      %c0_10 = arith.constant 0 : index
      %13 = arith.index_cast %12 : i32 to index
      %c0_11 = arith.constant 0 : index
      %c0_12 = arith.constant 0 : index
      %14 = vector.load %arg1[%c0_10, %13, %c0_11, %c0_12] : memref<1x16x32x128xbf16, #tpu.memory_space<vmem>>, vector<1x1x32x128xbf16>
      %15 = vector.shape_cast %14 : vector<1x1x32x128xbf16> to vector<32x128xbf16>
      %cst_13 = arith.constant dense<0.000000e+00> : vector<128x128xf32>
      %16 = tpu.matmul %0, %15, %cst_13 {dimension_numbers = #tpu.dot_dimension_numbers<[1], [0], [0], [1], [0, 0, 1, 1], [], []>} : vector<128x32xbf16>, vector<32x128xbf16>, vector<128x128xf32> -> vector<128x128xf32>
      %cst_14 = arith.constant 0.000000e+00 : f32
      %17 = vector.broadcast %cst_14 : f32 to vector<128x128xf32>
      %18 = arith.maximumf %16, %17 : vector<128x128xf32>
      %19 = arith.truncf %18 : vector<128x128xf32> to vector<128x128xbf16>
      %cst_15 = arith.constant dense<0.000000e+00> : vector<128x128xf32>
      %20 = tpu.matmul %1, %19, %cst_15 {dimension_numbers = #tpu.dot_dimension_numbers<[1], [0], [0], [1], [0, 0, 1, 1], [], []>} : vector<128x128xbf16>, vector<128x128xbf16>, vector<128x128xf32> -> vector<128x128xf32>
      %c0_16 = arith.constant 0 : index
      %21 = arith.index_cast %12 : i32 to index
      %c0_17 = arith.constant 0 : index
      %c0_18 = arith.constant 0 : index
      %22 = vector.load %arg2[%c0_16, %21, %c0_17, %c0_18] : memref<1x16x4x128xbf16, #tpu.memory_space<vmem>>, vector<1x1x4x128xbf16>
      %23 = vector.shape_cast %22 : vector<1x1x4x128xbf16> to vector<4x128xbf16>
      %24 = arith.extf %23 : vector<4x128xbf16> to vector<4x128xf32>
      %25 = vector.extract_strided_slice %20 {offsets = [0, 0], sizes = [32, 128], strides = [1, 1]} : vector<128x128xf32> to vector<32x128xf32>
      %26 = vector.extract_strided_slice %24 {offsets = [0, 0], sizes = [1, 128], strides = [1, 1]} : vector<4x128xf32> to vector<1x128xf32>
      %27 = vector.broadcast %26 : vector<1x128xf32> to vector<32x128xf32>
      %28 = arith.addf %25, %27 : vector<32x128xf32>
      %29 = vector.extract_strided_slice %20 {offsets = [32, 0], sizes = [32, 128], strides = [1, 1]} : vector<128x128xf32> to vector<32x128xf32>
      %30 = vector.extract_strided_slice %24 {offsets = [1, 0], sizes = [1, 128], strides = [1, 1]} : vector<4x128xf32> to vector<1x128xf32>
      %31 = vector.broadcast %30 : vector<1x128xf32> to vector<32x128xf32>
      %32 = arith.addf %29, %31 : vector<32x128xf32>
      %33 = arith.maximumf %28, %32 : vector<32x128xf32>
      %34 = vector.extract_strided_slice %20 {offsets = [64, 0], sizes = [32, 128], strides = [1, 1]} : vector<128x128xf32> to vector<32x128xf32>
      %35 = vector.extract_strided_slice %24 {offsets = [2, 0], sizes = [1, 128], strides = [1, 1]} : vector<4x128xf32> to vector<1x128xf32>
      %36 = vector.broadcast %35 : vector<1x128xf32> to vector<32x128xf32>
      %37 = arith.addf %34, %36 : vector<32x128xf32>
      %38 = arith.maximumf %33, %37 : vector<32x128xf32>
      %39 = vector.extract_strided_slice %20 {offsets = [96, 0], sizes = [32, 128], strides = [1, 1]} : vector<128x128xf32> to vector<32x128xf32>
      %40 = vector.extract_strided_slice %24 {offsets = [3, 0], sizes = [1, 128], strides = [1, 1]} : vector<4x128xf32> to vector<1x128xf32>
      %41 = vector.broadcast %40 : vector<1x128xf32> to vector<32x128xf32>
      %42 = arith.addf %39, %41 : vector<32x128xf32>
      %43 = arith.maximumf %38, %42 : vector<32x128xf32>
      %44 = arith.maximumf %arg8, %43 : vector<32x128xf32>
      %c1_i32_19 = arith.constant 1 : i32
      %45 = arith.addi %11, %c1_i32_19 : i32
      %c0_20 = arith.constant 0 : index
      %46 = arith.index_cast %45 : i32 to index
      %c0_21 = arith.constant 0 : index
      %c0_22 = arith.constant 0 : index
      %47 = vector.load %arg1[%c0_20, %46, %c0_21, %c0_22] : memref<1x16x32x128xbf16, #tpu.memory_space<vmem>>, vector<1x1x32x128xbf16>
      %48 = vector.shape_cast %47 : vector<1x1x32x128xbf16> to vector<32x128xbf16>
      %cst_23 = arith.constant dense<0.000000e+00> : vector<128x128xf32>
      %49 = tpu.matmul %0, %48, %cst_23 {dimension_numbers = #tpu.dot_dimension_numbers<[1], [0], [0], [1], [0, 0, 1, 1], [], []>} : vector<128x32xbf16>, vector<32x128xbf16>, vector<128x128xf32> -> vector<128x128xf32>
      %cst_24 = arith.constant 0.000000e+00 : f32
      %50 = vector.broadcast %cst_24 : f32 to vector<128x128xf32>
      %51 = arith.maximumf %49, %50 : vector<128x128xf32>
      %52 = arith.truncf %51 : vector<128x128xf32> to vector<128x128xbf16>
      %cst_25 = arith.constant dense<0.000000e+00> : vector<128x128xf32>
      %53 = tpu.matmul %1, %52, %cst_25 {dimension_numbers = #tpu.dot_dimension_numbers<[1], [0], [0], [1], [0, 0, 1, 1], [], []>} : vector<128x128xbf16>, vector<128x128xbf16>, vector<128x128xf32> -> vector<128x128xf32>
      %c0_26 = arith.constant 0 : index
      %54 = arith.index_cast %45 : i32 to index
      %c0_27 = arith.constant 0 : index
      %c0_28 = arith.constant 0 : index
      %55 = vector.load %arg2[%c0_26, %54, %c0_27, %c0_28] : memref<1x16x4x128xbf16, #tpu.memory_space<vmem>>, vector<1x1x4x128xbf16>
      %56 = vector.shape_cast %55 : vector<1x1x4x128xbf16> to vector<4x128xbf16>
      %57 = arith.extf %56 : vector<4x128xbf16> to vector<4x128xf32>
      %58 = vector.extract_strided_slice %53 {offsets = [0, 0], sizes = [32, 128], strides = [1, 1]} : vector<128x128xf32> to vector<32x128xf32>
      %59 = vector.extract_strided_slice %57 {offsets = [0, 0], sizes = [1, 128], strides = [1, 1]} : vector<4x128xf32> to vector<1x128xf32>
      %60 = vector.broadcast %59 : vector<1x128xf32> to vector<32x128xf32>
      %61 = arith.addf %58, %60 : vector<32x128xf32>
      %62 = vector.extract_strided_slice %53 {offsets = [32, 0], sizes = [32, 128], strides = [1, 1]} : vector<128x128xf32> to vector<32x128xf32>
      %63 = vector.extract_strided_slice %57 {offsets = [1, 0], sizes = [1, 128], strides = [1, 1]} : vector<4x128xf32> to vector<1x128xf32>
      %64 = vector.broadcast %63 : vector<1x128xf32> to vector<32x128xf32>
      %65 = arith.addf %62, %64 : vector<32x128xf32>
      %66 = arith.maximumf %61, %65 : vector<32x128xf32>
      %67 = vector.extract_strided_slice %53 {offsets = [64, 0], sizes = [32, 128], strides = [1, 1]} : vector<128x128xf32> to vector<32x128xf32>
      %68 = vector.extract_strided_slice %57 {offsets = [2, 0], sizes = [1, 128], strides = [1, 1]} : vector<4x128xf32> to vector<1x128xf32>
      %69 = vector.broadcast %68 : vector<1x128xf32> to vector<32x128xf32>
      %70 = arith.addf %67, %69 : vector<32x128xf32>
      %71 = arith.maximumf %66, %70 : vector<32x128xf32>
      %72 = vector.extract_strided_slice %53 {offsets = [96, 0], sizes = [32, 128], strides = [1, 1]} : vector<128x128xf32> to vector<32x128xf32>
      %73 = vector.extract_strided_slice %57 {offsets = [3, 0], sizes = [1, 128], strides = [1, 1]} : vector<4x128xf32> to vector<1x128xf32>
      %74 = vector.broadcast %73 : vector<1x128xf32> to vector<32x128xf32>
      %75 = arith.addf %72, %74 : vector<32x128xf32>
      %76 = arith.maximumf %71, %75 : vector<32x128xf32>
      %77 = arith.maximumf %44, %76 : vector<32x128xf32>
      scf.yield %77 : vector<32x128xf32>
    }
    %c8_i32_3 = arith.constant 8 : i32
    %c0_4 = arith.constant 0 : index
    %c0_5 = arith.constant 0 : index
    %5 = vector.load %arg5[%c0_4, %c0_5] : memref<32x1xf32, #tpu.memory_space<vmem>>, vector<32x1xf32>
    %6 = vector.broadcast %5 : vector<32x1xf32> to vector<32x128xf32>
    %7 = arith.addf %4, %6 : vector<32x128xf32>
    %cst_6 = arith.constant 0.000000e+00 : f32
    %8 = vector.broadcast %cst_6 : f32 to vector<32x128xf32>
    %9 = arith.maximumf %7, %8 : vector<32x128xf32>
    %c0_7 = arith.constant 0 : index
    %c0_8 = arith.constant 0 : index
    %10 = vector.load %arg6[%c0_7, %c0_8] : memref<32x128xf32, #tpu.memory_space<vmem>>, vector<32x128xf32>
    tpu.vector_store %arg6[%c0_7, %c0_8], %9 {strides = array<i32>} : memref<32x128xf32, #tpu.memory_space<vmem>>, vector<32x128xf32>,
    return
  }
  func.func @transform_0(%arg0: i32) -> (i32, i32, i32, i32) {
    %c0_i32 = arith.constant 0 : i32
    %c0_i32_0 = arith.constant 0 : i32
    %c0_i32_1 = arith.constant 0 : i32
    %c0_i32_2 = arith.constant 0 : i32
    return %arg0, %c0_i32, %c0_i32_0, %c0_i32_1 : i32, i32, i32, i32
  }
  func.func @transform_1(%arg0: i32) -> (i32, i32, i32, i32) {
    %c0_i32 = arith.constant 0 : i32
    %c0_i32_0 = arith.constant 0 : i32
    %c0_i32_1 = arith.constant 0 : i32
    %c0_i32_2 = arith.constant 0 : i32
    return %arg0, %c0_i32, %c0_i32_0, %c0_i32_1 : i32, i32, i32, i32
  }
  func.func @transform_2(%arg0: i32) -> (i32, i32) {
    %c0_i32 = arith.constant 0 : i32
    %c0_i32_0 = arith.constant 0 : i32
    %c0_i32_1 = arith.constant 0 : i32
    return %c0_i32, %c0_i32_0 : i32, i32
  }
  func.func @transform_3(%arg0: i32) -> (i32, i32) {
    %c0_i32 = arith.constant 0 : i32
    %c0_i32_0 = arith.constant 0 : i32
    %c0_i32_1 = arith.constant 0 : i32
    return %c0_i32, %c0_i32_0 : i32, i32
  }
  func.func @transform_4(%arg0: i32) -> (i32, i32) {
    %c0_i32 = arith.constant 0 : i32
    %c0_i32_0 = arith.constant 0 : i32
    %c0_i32_1 = arith.constant 0 : i32
    return %c0_i32, %c0_i32_0 : i32, i32
  }
  func.func @transform_5(%arg0: i32) -> (i32, i32) {
    %c0_i32 = arith.constant 0 : i32
    %c0_i32_0 = arith.constant 0 : i32
    return %c0_i32, %arg0 : i32, i32
  }
}

</mosaic_0001>

<llo_original>
// kernel: custom-call.4
$region0: #{custom-call.4}
  %s0 = inlined_call_operand.vmem [shape: f32[2,16], index: 0, kind: output, shape index: {}]

// kernel: sa_module_forward.1
$region0: #{sa_module_forward.1}
  #allocation0 [shape = 'u32[]', space=smem, size = 0x4, offset = 0x4, fixed_abs, tag = 'smem constant byte address 0x4 - core index']
  #allocation1 [shape = 'u32[144,128]{1,0:T(1,128)}', space=vmem, size = 0x12000, scoped, tag = 'internal scratch']
  %s0 = inlined_call_operand.vmem [shape: bf16[1,16,32,128], index: 0, kind: input, shape index: {}]
  %s1 = inlined_call_operand.vmem [shape: bf16[1,16,4,128], index: 1, kind: input, shape index: {}]
  %s2 = inlined_call_operand.vmem [shape: bf16[128,32], index: 2, kind: input, shape index: {}]
  %s3 = inlined_call_operand.vmem [shape: bf16[128,128], index: 3, kind: input, shape index: {}]
  %s4 = inlined_call_operand.vmem [shape: f32[32,1], index: 4, kind: input, shape index: {}]
  %s5 = inlined_call_operand.vmem [shape: f32[32,128], index: 5, kind: output, shape index: {}]
  %s6 = sld [smem:[#allocation0]]
  $region37: #{sa_module_forward.1} parent=0
    _
  %s8 = ssub.s32 1, %s6
  %s9 = scalar_select 0, %s8, %s6
  // Predicated region
  $region2: #{sa_module_forward.1} parent=0 // pred_check
    _
  $region3: #{sa_module_forward.1} parent=0 // pred_check_branch
    %11 = sbr.rel (0) target = $region5
  $region4: #{sa_module_forward.1} parent=0 // pred_region
    _
  $region5: #{sa_module_forward.1} parent=0 // pred_fallthru
    _
  // Predicated region
  $region6: #{sa_module_forward.1} parent=0 // pred_check
    _
  $region7: #{sa_module_forward.1} parent=0 // pred_check_branch
    %13 = sbr.rel (0) target = $region9
  $region8: #{sa_module_forward.1} parent=0 // pred_region
    _
  $region9: #{sa_module_forward.1} parent=0 // pred_fallthru
    _
  // Predicated region
  $region10: #{sa_module_forward.1} parent=0 // pred_check
    _
  $region11: #{sa_module_forward.1} parent=0 // pred_check_branch
    %15 = sbr.rel (0) target = $region13
  $region12: #{sa_module_forward.1} parent=0 // pred_region
    _
  $region13: #{sa_module_forward.1} parent=0 // pred_fallthru
    _
  // Predicated region
  $region14: #{sa_module_forward.1} parent=0 // pred_check
    _
  $region15: #{sa_module_forward.1} parent=0 // pred_check_branch
    %17 = sbr.rel (0) target = $region17
  $region16: #{sa_module_forward.1} parent=0 // pred_region
    _
  $region17: #{sa_module_forward.1} parent=0 // pred_fallthru
    _
  // Predicated region
  $region18: #{sa_module_forward.1} parent=0 // pred_check
    _
  $region19: #{sa_module_forward.1} parent=0 // pred_check_branch
    %19 = sbr.rel (0) target = $region21
  $region20: #{sa_module_forward.1} parent=0 // pred_region
    _
  $region21: #{sa_module_forward.1} parent=0 // pred_fallthru
    _
  %v21 = vld [vmem:[%s2] sm:$0xf]
  %v22 = vld [vmem:[%s2 + $0x4] sm:$0xf]
  %v23 = vld [vmem:[%s2 + $0x8] sm:$0xf]
  %v24 = vld [vmem:[%s2 + $0xc] sm:$0xf]
  %v25 = vld [vmem:[%s2 + $0x10] sm:$0xf]
  %v26 = vld [vmem:[%s2 + $0x14] sm:$0xf]
  %v27 = vld [vmem:[%s2 + $0x18] sm:$0xf]
  %v28 = vld [vmem:[%s2 + $0x1c] sm:$0xf]
  %v29 = vld [vmem:[%s2 + $0x20] sm:$0xf]
  %v30 = vld [vmem:[%s2 + $0x24] sm:$0xf]
  %v31 = vld [vmem:[%s2 + $0x28] sm:$0xf]
  %v32 = vld [vmem:[%s2 + $0x2c] sm:$0xf]
  %v33 = vld [vmem:[%s2 + $0x30] sm:$0xf]
  %v34 = vld [vmem:[%s2 + $0x34] sm:$0xf]
  %v35 = vld [vmem:[%s2 + $0x38] sm:$0xf]
  %v36 = vld [vmem:[%s2 + $0x3c] sm:$0xf]
  %v37 = vld [vmem:[%s3] sm:$0xf]
  %v38 = vld [vmem:[%s3 + $0x4] sm:$0xf]
  %v39 = vld [vmem:[%s3 + $0x8] sm:$0xf]
  %v40 = vld [vmem:[%s3 + $0xc] sm:$0xf]
  %v41 = vld [vmem:[%s3 + $0x10] sm:$0xf]
  %v42 = vld [vmem:[%s3 + $0x14] sm:$0xf]
  %v43 = vld [vmem:[%s3 + $0x18] sm:$0xf]
  %v44 = vld [vmem:[%s3 + $0x1c] sm:$0xf]
  %v45 = vld [vmem:[%s3 + $0x20] sm:$0xf]
  %v46 = vld [vmem:[%s3 + $0x24] sm:$0xf]
  %v47 = vld [vmem:[%s3 + $0x28] sm:$0xf]
  %v48 = vld [vmem:[%s3 + $0x2c] sm:$0xf]
  %v49 = vld [vmem:[%s3 + $0x30] sm:$0xf]
  %v50 = vld [vmem:[%s3 + $0x34] sm:$0xf]
  %v51 = vld [vmem:[%s3 + $0x38] sm:$0xf]
  %v52 = vld [vmem:[%s3 + $0x3c] sm:$0xf]
  loop: start=0, step=1, limit=8
  $region22: #{sa_module_forward.1} parent=0 // loop_pre_header
    _
  $region23: #{sa_module_forward.1} parent=0 // loop_header
    %s54 = sphi 0, %s58
    %p55 = scmp.ge.s32.totalorder %s54, 8
    %v59 = vphi -1e+30, %v752
    %v60 = vphi -1e+30, %v753
    %v61 = vphi -1e+30, %v754
    %v62 = vphi -1e+30, %v755
  $region24: #{sa_module_forward.1} parent=0 // loop_header_branch
    %57 = sbr.rel (%p55) target = $region28
  $region25: #{sa_module_forward.1} parent=0 // loop_body
    %s63 = smul.u32 %s54, 2
    %s64 = smul.u32 %s63, 4
    %s65 = smul.addr %s64, 4
    %s66 = scalar_lea.vmem %s0, %s65
    %v67 = vld [vmem:[%s66] sm:$0xf]
    %v68 = vld [vmem:[%s66 + $0x4] sm:$0xf]
    %v69 = vld [vmem:[%s66 + $0x8] sm:$0xf]
    %v70 = vld [vmem:[%s66 + $0xc] sm:$0xf]
    %v87 = vunpack.c.l.b16 %v21
    %v88 = vunpack.c.l.b16 %v22
    %v89 = vunpack.c.l.b16 %v23
    %v90 = vunpack.c.l.b16 %v24
    %v91 = vunpack.c.l.b16 %v25
    %v92 = vunpack.c.l.b16 %v26
    %v93 = vunpack.c.l.b16 %v27
    %v94 = vunpack.c.l.b16 %v28
    %v95 = vunpack.c.l.b16 %v29
    %v96 = vunpack.c.l.b16 %v30
    %v97 = vunpack.c.l.b16 %v31
    %v98 = vunpack.c.l.b16 %v32
    %v99 = vunpack.c.l.b16 %v33
    %v100 = vunpack.c.l.b16 %v34
    %v101 = vunpack.c.l.b16 %v35
    %v102 = vunpack.c.l.b16 %v36
    %v103 = vpack.c.b16 %v88, %v87
    %v104 = vpack.c.b16 %v90, %v89
    %v105 = vpack.c.b16 %v92, %v91
    %v106 = vpack.c.b16 %v94, %v93
    %v107 = vpack.c.b16 %v96, %v95
    %v108 = vpack.c.b16 %v98, %v97
    %v109 = vpack.c.b16 %v100, %v99
    %v110 = vpack.c.b16 %v102, %v101
    %v115 = vunpack.c.l.b16 %v67
    %v116 = vunpack.c.l.b16 %v68
    %v117 = vunpack.c.l.b16 %v69
    %v118 = vunpack.c.l.b16 %v70
    %v119 = vpack.c.b16 %v116, %v115
    %v120 = vpack.c.b16 %v118, %v117
    %vm123 = vcmask 261120
    %v125 = vsel %vm123, %v103, 0
    %v128 = vsel %vm123, %v104, 0
    %v131 = vsel %vm123, %v105, 0
    %v134 = vsel %vm123, %v106, 0
    %v137 = vsel %vm123, %v107, 0
    %v140 = vsel %vm123, %v108, 0
    %v143 = vsel %vm123, %v109, 0
    %v146 = vsel %vm123, %v110, 0
    %148 = vmatprep.subr.bf16.mxu0 0
    %149 = vmatpush1.bf16.msra.mxu0 %v119
    %150 = vmatprep.subr.bf16.mxu0 0
    %151 = vmatpush1.bf16.msra.mxu0 %v120
    %152 = vmatprep.subr.bf16.mxu0 0
    %153 = vmatpush1.bf16.msra.mxu0 0
    %154 = vmatprep.subr.bf16.mxu0 0
    %155 = vmatpush1.bf16.msra.mxu0 0
    %156 = vmatprep.subr.bf16.mxu0 0
    %157 = vmatpush1.bf16.msra.mxu0 0
    %158 = vmatprep.subr.bf16.mxu0 0
    %159 = vmatpush1.bf16.msra.mxu0 0
    %160 = vmatprep.subr.bf16.mxu0 0
    %161 = vmatpush1.bf16.msra.mxu0 0
    %162 = vmatprep.subr.bf16.mxu0 0
    %163 = vmatpush1.bf16.msra.mxu0 0
    %164 = vmatprep.subr.bf16.mxu0 0
    %165 = vmatpush1.bf16.msra.mxu0 0
    %166 = vmatprep.subr.bf16.mxu0 0
    %167 = vmatpush1.bf16.msra.mxu0 0
    %168 = vmatprep.subr.bf16.mxu0 0
    %169 = vmatpush1.bf16.msra.mxu0 0
    %170 = vmatprep.subr.bf16.mxu0 0
    %171 = vmatpush1.bf16.msra.mxu0 0
    %172 = vmatprep.subr.bf16.mxu0 0
    %173 = vmatpush1.bf16.msra.mxu0 0
    %174 = vmatprep.subr.bf16.mxu0 0
    %175 = vmatpush1.bf16.msra.mxu0 0
    %176 = vmatprep.subr.bf16.mxu0 0
    %177 = vmatpush1.bf16.msra.mxu0 0
    %178 = vmatprep.subr.bf16.mxu0 0
    %179 = vmatpush1.bf16.msra.mxu0 0
    %180 = vmatprep.mubr.bf16.mxu0 0
    %181 = vmatmul.mubr.bf16.gmra.mrb[0].mxu0 %v125
    %v182 = vpop.f32.mrb[0].mxu0
    %v183 = vadd.f32 0.0, %v182
    %v184 = vpop.f32.mrb[0].mxu0
    %v185 = vpop.f32.mrb[0].mxu0
    %v186 = vadd.f32 0.0, %v185
    %v187 = vpop.f32.mrb[0].mxu0
    %188 = vmatprep.mubr.bf16.mxu0 0
    %189 = vmatmul.mubr.bf16.gmra.mrb[0].mxu0 %v128
    %v190 = vpop.f32.mrb[0].mxu0
    %v191 = vadd.f32 0.0, %v190
    %v192 = vpop.f32.mrb[0].mxu0
    %v193 = vpop.f32.mrb[0].mxu0
    %v194 = vadd.f32 0.0, %v193
    %v195 = vpop.f32.mrb[0].mxu0
    %196 = vmatprep.mubr.bf16.mxu0 0
    %197 = vmatmul.mubr.bf16.gmra.mrb[0].mxu0 %v131
    %v198 = vpop.f32.mrb[0].mxu0
    %v199 = vadd.f32 0.0, %v198
    %v200 = vpop.f32.mrb[0].mxu0
    %v201 = vpop.f32.mrb[0].mxu0
    %v202 = vadd.f32 0.0, %v201
    %v203 = vpop.f32.mrb[0].mxu0
    %204 = vmatprep.mubr.bf16.mxu0 0
    %205 = vmatmul.mubr.bf16.gmra.mrb[0].mxu0 %v134
    %v206 = vpop.f32.mrb[0].mxu0
    %v207 = vadd.f32 0.0, %v206
    %v208 = vpop.f32.mrb[0].mxu0
    %v209 = vpop.f32.mrb[0].mxu0
    %v210 = vadd.f32 0.0, %v209
    %v211 = vpop.f32.mrb[0].mxu0
    %212 = vmatprep.mubr.bf16.mxu0 0
    %213 = vmatmul.mubr.bf16.gmra.mrb[0].mxu0 %v137
    %v214 = vpop.f32.mrb[0].mxu0
    %v215 = vadd.f32 0.0, %v214
    %v216 = vpop.f32.mrb[0].mxu0
    %v217 = vpop.f32.mrb[0].mxu0
    %v218 = vadd.f32 0.0, %v217
    %v219 = vpop.f32.mrb[0].mxu0
    %220 = vmatprep.mubr.bf16.mxu0 0
    %221 = vmatmul.mubr.bf16.gmra.mrb[0].mxu0 %v140
    %v222 = vpop.f32.mrb[0].mxu0
    %v223 = vadd.f32 0.0, %v222
    %v224 = vpop.f32.mrb[0].mxu0
    %v225 = vpop.f32.mrb[0].mxu0
    %v226 = vadd.f32 0.0, %v225
    %v227 = vpop.f32.mrb[0].mxu0
    %228 = vmatprep.mubr.bf16.mxu0 0
    %229 = vmatmul.mubr.bf16.gmra.mrb[0].mxu0 %v143
    %v230 = vpop.f32.mrb[0].mxu0
    %v231 = vadd.f32 0.0, %v230
    %v232 = vpop.f32.mrb[0].mxu0
    %v233 = vpop.f32.mrb[0].mxu0
    %v234 = vadd.f32 0.0, %v233
    %v235 = vpop.f32.mrb[0].mxu0
    %236 = vmatprep.mubr.bf16.mxu0 0
    %237 = vmatmul.mubr.bf16.gmra.mrb[0].mxu0 %v146
    %v238 = vpop.f32.mrb[0].mxu0
    %v239 = vadd.f32 0.0, %v238
    %v240 = vpop.f32.mrb[0].mxu0
    %v241 = vpop.f32.mrb[0].mxu0
    %v242 = vadd.f32 0.0, %v241
    %v243 = vpop.f32.mrb[0].mxu0
    %244 = vdwg.mxu0
    %v245 = vmax.f32 %v183, 0.0
    %v246 = vmax.f32 %v186, 0.0
    %v247 = vmax.f32 %v191, 0.0
    %v248 = vmax.f32 %v194, 0.0
    %v249 = vmax.f32 %v199, 0.0
    %v250 = vmax.f32 %v202, 0.0
    %v251 = vmax.f32 %v207, 0.0
    %v252 = vmax.f32 %v210, 0.0
    %v253 = vmax.f32 %v215, 0.0
    %v254 = vmax.f32 %v218, 0.0
    %v255 = vmax.f32 %v223, 0.0
    %v256 = vmax.f32 %v226, 0.0
    %v257 = vmax.f32 %v231, 0.0
    %v258 = vmax.f32 %v234, 0.0
    %v259 = vmax.f32 %v239, 0.0
    %v260 = vmax.f32 %v242, 0.0
    %v261 = vpack.c.bf16 %v246, %v245
    %v262 = vpack.c.bf16 %v248, %v247
    %v263 = vpack.c.bf16 %v250, %v249
    %v264 = vpack.c.bf16 %v252, %v251
    %v265 = vpack.c.bf16 %v254, %v253
    %v266 = vpack.c.bf16 %v256, %v255
    %v267 = vpack.c.bf16 %v258, %v257
    %v268 = vpack.c.bf16 %v260, %v259
    %v285 = vunpack.c.l.b16 %v37
    %v286 = vunpack.c.l.b16 %v38
    %v287 = vunpack.c.l.b16 %v39
    %v288 = vunpack.c.l.b16 %v40
    %v289 = vunpack.c.l.b16 %v41
    %v290 = vunpack.c.l.b16 %v42
    %v291 = vunpack.c.l.b16 %v43
    %v292 = vunpack.c.l.b16 %v44
    %v293 = vunpack.c.l.b16 %v45
    %v294 = vunpack.c.l.b16 %v46
    %v295 = vunpack.c.l.b16 %v47
    %v296 = vunpack.c.l.b16 %v48
    %v297 = vunpack.c.l.b16 %v49
    %v298 = vunpack.c.l.b16 %v50
    %v299 = vunpack.c.l.b16 %v51
    %v300 = vunpack.c.l.b16 %v52
    %v301 = vpack.c.b16 %v286, %v285
    %v302 = vpack.c.b16 %v288, %v287
    %v303 = vpack.c.b16 %v290, %v289
    %v304 = vpack.c.b16 %v292, %v291
    %v305 = vpack.c.b16 %v294, %v293
    %v306 = vpack.c.b16 %v296, %v295
    %v307 = vpack.c.b16 %v298, %v297
    %v308 = vpack.c.b16 %v300, %v299
    %317 = vmatprep.subr.bf16.mxu0 0
    %318 = vmatpush1.bf16.msra.mxu0 %v261
    %319 = vmatprep.subr.bf16.mxu0 0
    %320 = vmatpush1.bf16.msra.mxu0 %v262
    %321 = vmatprep.subr.bf16.mxu0 0
    %322 = vmatpush1.bf16.msra.mxu0 %v263
    %323 = vmatprep.subr.bf16.mxu0 0
    %324 = vmatpush1.bf16.msra.mxu0 %v264
    %325 = vmatprep.subr.bf16.mxu0 0
    %326 = vmatpush1.bf16.msra.mxu0 %v265
    %327 = vmatprep.subr.bf16.mxu0 0
    %328 = vmatpush1.bf16.msra.mxu0 %v266
    %329 = vmatprep.subr.bf16.mxu0 0
    %330 = vmatpush1.bf16.msra.mxu0 %v267
    %331 = vmatprep.subr.bf16.mxu0 0
    %332 = vmatpush1.bf16.msra.mxu0 %v268
    %333 = vmatprep.subr.bf16.mxu0 0
    %334 = vmatpush1.bf16.msra.mxu0 0
    %335 = vmatprep.subr.bf16.mxu0 0
    %336 = vmatpush1.bf16.msra.mxu0 0
    %337 = vmatprep.subr.bf16.mxu0 0
    %338 = vmatpush1.bf16.msra.mxu0 0
    %339 = vmatprep.subr.bf16.mxu0 0
    %340 = vmatpush1.bf16.msra.mxu0 0
    %341 = vmatprep.subr.bf16.mxu0 0
    %342 = vmatpush1.bf16.msra.mxu0 0
    %343 = vmatprep.subr.bf16.mxu0 0
    %344 = vmatpush1.bf16.msra.mxu0 0
    %345 = vmatprep.subr.bf16.mxu0 0
    %346 = vmatpush1.bf16.msra.mxu0 0
    %347 = vmatprep.subr.bf16.mxu0 0
    %348 = vmatpush1.bf16.msra.mxu0 0
    %349 = vmatprep.mubr.bf16.mxu0 0
    %350 = vmatmul.mubr.bf16.gmra.mrb[0].mxu0 %v301
    %v351 = vpop.f32.mrb[0].mxu0
    %v352 = vadd.f32 0.0, %v351
    %v353 = vpop.f32.mrb[0].mxu0
    %v354 = vpop.f32.mrb[0].mxu0
    %v355 = vadd.f32 0.0, %v354
    %v356 = vpop.f32.mrb[0].mxu0
    %357 = vmatprep.mubr.bf16.mxu0 0
    %358 = vmatmul.mubr.bf16.gmra.mrb[0].mxu0 %v302
    %v359 = vpop.f32.mrb[0].mxu0
    %v360 = vadd.f32 0.0, %v359
    %v361 = vpop.f32.mrb[0].mxu0
    %v362 = vpop.f32.mrb[0].mxu0
    %v363 = vadd.f32 0.0, %v362
    %v364 = vpop.f32.mrb[0].mxu0
    %365 = vmatprep.mubr.bf16.mxu0 0
    %366 = vmatmul.mubr.bf16.gmra.mrb[0].mxu0 %v303
    %v367 = vpop.f32.mrb[0].mxu0
    %v368 = vadd.f32 0.0, %v367
    %v369 = vpop.f32.mrb[0].mxu0
    %v370 = vpop.f32.mrb[0].mxu0
    %v371 = vadd.f32 0.0, %v370
    %v372 = vpop.f32.mrb[0].mxu0
    %373 = vmatprep.mubr.bf16.mxu0 0
    %374 = vmatmul.mubr.bf16.gmra.mrb[0].mxu0 %v304
    %v375 = vpop.f32.mrb[0].mxu0
    %v376 = vadd.f32 0.0, %v375
    %v377 = vpop.f32.mrb[0].mxu0
    %v378 = vpop.f32.mrb[0].mxu0
    %v379 = vadd.f32 0.0, %v378
    %v380 = vpop.f32.mrb[0].mxu0
    %381 = vmatprep.mubr.bf16.mxu0 0
    %382 = vmatmul.mubr.bf16.gmra.mrb[0].mxu0 %v305
    %v383 = vpop.f32.mrb[0].mxu0
    %v384 = vadd.f32 0.0, %v383
    %v385 = vpop.f32.mrb[0].mxu0
    %v386 = vpop.f32.mrb[0].mxu0
    %v387 = vadd.f32 0.0, %v386
    %v388 = vpop.f32.mrb[0].mxu0
    %389 = vmatprep.mubr.bf16.mxu0 0
    %390 = vmatmul.mubr.bf16.gmra.mrb[0].mxu0 %v306
    %v391 = vpop.f32.mrb[0].mxu0
    %v392 = vadd.f32 0.0, %v391
    %v393 = vpop.f32.mrb[0].mxu0
    %v394 = vpop.f32.mrb[0].mxu0
    %v395 = vadd.f32 0.0, %v394
    %v396 = vpop.f32.mrb[0].mxu0
    %397 = vmatprep.mubr.bf16.mxu0 0
    %398 = vmatmul.mubr.bf16.gmra.mrb[0].mxu0 %v307
    %v399 = vpop.f32.mrb[0].mxu0
    %v400 = vadd.f32 0.0, %v399
    %v401 = vpop.f32.mrb[0].mxu0
    %v402 = vpop.f32.mrb[0].mxu0
    %v403 = vadd.f32 0.0, %v402
    %v404 = vpop.f32.mrb[0].mxu0
    %405 = vmatprep.mubr.bf16.mxu0 0
    %406 = vmatmul.mubr.bf16.gmra.mrb[0].mxu0 %v308
    %v407 = vpop.f32.mrb[0].mxu0
    %v408 = vadd.f32 0.0, %v407
    %v409 = vpop.f32.mrb[0].mxu0
    %v410 = vpop.f32.mrb[0].mxu0
    %v411 = vadd.f32 0.0, %v410
    %v412 = vpop.f32.mrb[0].mxu0
    %413 = vdwg.mxu0
    %s414 = smul.addr %s63, 2
    %s415 = scalar_lea.vmem %s1, %s414
    %v416 = vld [vmem:[%s415] sm:$0x3]
    %v417 = vunpack.c.l.bf16 %v416
    %v418 = vlaneseq
    %v419 = vshrl.u32 %v418, 7
    %v420 = vsub.s32 0, %v419
    %v421 = vrot.slane %v417, %v420
    %v422 = vadd.f32 %v352, %v421
    %v423 = vadd.f32 %v355, %v421
    %v424 = vadd.f32 %v360, %v421
    %v425 = vadd.f32 %v363, %v421
    %v426 = vlaneseq
    %v427 = vshrl.u32 %v426, 7
    %v428 = vsub.s32 1, %v427
    %v429 = vrot.slane %v417, %v428
    %v430 = vadd.f32 %v368, %v429
    %v431 = vadd.f32 %v371, %v429
    %v432 = vadd.f32 %v376, %v429
    %v433 = vadd.f32 %v379, %v429
    %v434 = vmax.f32 %v422, %v430
    %v435 = vmax.f32 %v423, %v431
    %v436 = vmax.f32 %v424, %v432
    %v437 = vmax.f32 %v425, %v433
    %v438 = vlaneseq
    %v439 = vshrl.u32 %v438, 7
    %v440 = vsub.s32 2, %v439
    %v441 = vrot.slane %v417, %v440
    %v442 = vadd.f32 %v384, %v441
    %v443 = vadd.f32 %v387, %v441
    %v444 = vadd.f32 %v392, %v441
    %v445 = vadd.f32 %v395, %v441
    %v446 = vmax.f32 %v434, %v442
    %v447 = vmax.f32 %v435, %v443
    %v448 = vmax.f32 %v436, %v444
    %v449 = vmax.f32 %v437, %v445
    %v450 = vlaneseq
    %v451 = vshrl.u32 %v450, 7
    %v452 = vsub.s32 3, %v451
    %v453 = vrot.slane %v417, %v452
    %v454 = vadd.f32 %v400, %v453
    %v455 = vadd.f32 %v403, %v453
    %v456 = vadd.f32 %v408, %v453
    %v457 = vadd.f32 %v411, %v453
    %v458 = vmax.f32 %v446, %v454
    %v459 = vmax.f32 %v447, %v455
    %v460 = vmax.f32 %v448, %v456
    %v461 = vmax.f32 %v449, %v457
    %v462 = vmax.f32 %v59, %v458
    %v463 = vmax.f32 %v60, %v459
    %v464 = vmax.f32 %v61, %v460
    %v465 = vmax.f32 %v62, %v461
    %s466 = sadd.s32 %s63, 1
    %s467 = smul.u32 %s466, 4
    %s468 = smul.addr %s467, 4
    %s469 = scalar_lea.vmem %s0, %s468
    %v470 = vld [vmem:[%s469] sm:$0xf]
    %v471 = vld [vmem:[%s469 + $0x4] sm:$0xf]
    %v472 = vld [vmem:[%s469 + $0x8] sm:$0xf]
    %v473 = vld [vmem:[%s469 + $0xc] sm:$0xf]
    %v478 = vunpack.c.l.b16 %v470
    %v479 = vunpack.c.l.b16 %v471
    %v480 = vunpack.c.l.b16 %v472
    %v481 = vunpack.c.l.b16 %v473
    %v482 = vpack.c.b16 %v479, %v478
    %v483 = vpack.c.b16 %v481, %v480
    %486 = vmatprep.subr.bf16.mxu0 0
    %487 = vmatpush1.bf16.msra.mxu0 %v482
    %488 = vmatprep.subr.bf16.mxu0 0
    %489 = vmatpush1.bf16.msra.mxu0 %v483
    %490 = vmatprep.subr.bf16.mxu0 0
    %491 = vmatpush1.bf16.msra.mxu0 0
    %492 = vmatprep.subr.bf16.mxu0 0
    %493 = vmatpush1.bf16.msra.mxu0 0
    %494 = vmatprep.subr.bf16.mxu0 0
    %495 = vmatpush1.bf16.msra.mxu0 0
    %496 = vmatprep.subr.bf16.mxu0 0
    %497 = vmatpush1.bf16.msra.mxu0 0
    %498 = vmatprep.subr.bf16.mxu0 0
    %499 = vmatpush1.bf16.msra.mxu0 0
    %500 = vmatprep.subr.bf16.mxu0 0
    %501 = vmatpush1.bf16.msra.mxu0 0
    %502 = vmatprep.subr.bf16.mxu0 0
    %503 = vmatpush1.bf16.msra.mxu0 0
    %504 = vmatprep.subr.bf16.mxu0 0
    %505 = vmatpush1.bf16.msra.mxu0 0
    %506 = vmatprep.subr.bf16.mxu0 0
    %507 = vmatpush1.bf16.msra.mxu0 0
    %508 = vmatprep.subr.bf16.mxu0 0
    %509 = vmatpush1.bf16.msra.mxu0 0
    %510 = vmatprep.subr.bf16.mxu0 0
    %511 = vmatpush1.bf16.msra.mxu0 0
    %512 = vmatprep.subr.bf16.mxu0 0
    %513 = vmatpush1.bf16.msra.mxu0 0
    %514 = vmatprep.subr.bf16.mxu0 0
    %515 = vmatpush1.bf16.msra.mxu0 0
    %516 = vmatprep.subr.bf16.mxu0 0
    %517 = vmatpush1.bf16.msra.mxu0 0
    %518 = vmatprep.mubr.bf16.mxu0 0
    %519 = vmatmul.mubr.bf16.gmra.mrb[0].mxu0 %v125
    %v520 = vpop.f32.mrb[0].mxu0
    %v521 = vadd.f32 0.0, %v520
    %v522 = vpop.f32.mrb[0].mxu0
    %v523 = vpop.f32.mrb[0].mxu0
    %v524 = vadd.f32 0.0, %v523
    %v525 = vpop.f32.mrb[0].mxu0
    %526 = vmatprep.mubr.bf16.mxu0 0
    %527 = vmatmul.mubr.bf16.gmra.mrb[0].mxu0 %v128
    %v528 = vpop.f32.mrb[0].mxu0
    %v529 = vadd.f32 0.0, %v528
    %v530 = vpop.f32.mrb[0].mxu0
    %v531 = vpop.f32.mrb[0].mxu0
    %v532 = vadd.f32 0.0, %v531
    %v533 = vpop.f32.mrb[0].mxu0
    %534 = vmatprep.mubr.bf16.mxu0 0
    %535 = vmatmul.mubr.bf16.gmra.mrb[0].mxu0 %v131
    %v536 = vpop.f32.mrb[0].mxu0
    %v537 = vadd.f32 0.0, %v536
    %v538 = vpop.f32.mrb[0].mxu0
    %v539 = vpop.f32.mrb[0].mxu0
    %v540 = vadd.f32 0.0, %v539
    %v541 = vpop.f32.mrb[0].mxu0
    %542 = vmatprep.mubr.bf16.mxu0 0
    %543 = vmatmul.mubr.bf16.gmra.mrb[0].mxu0 %v134
    %v544 = vpop.f32.mrb[0].mxu0
    %v545 = vadd.f32 0.0, %v544
    %v546 = vpop.f32.mrb[0].mxu0
    %v547 = vpop.f32.mrb[0].mxu0
    %v548 = vadd.f32 0.0, %v547
    %v549 = vpop.f32.mrb[0].mxu0
    %550 = vmatprep.mubr.bf16.mxu0 0
    %551 = vmatmul.mubr.bf16.gmra.mrb[0].mxu0 %v137
    %v552 = vpop.f32.mrb[0].mxu0
    %v553 = vadd.f32 0.0, %v552
    %v554 = vpop.f32.mrb[0].mxu0
    %v555 = vpop.f32.mrb[0].mxu0
    %v556 = vadd.f32 0.0, %v555
    %v557 = vpop.f32.mrb[0].mxu0
    %558 = vmatprep.mubr.bf16.mxu0 0
    %559 = vmatmul.mubr.bf16.gmra.mrb[0].mxu0 %v140
    %v560 = vpop.f32.mrb[0].mxu0
    %v561 = vadd.f32 0.0, %v560
    %v562 = vpop.f32.mrb[0].mxu0
    %v563 = vpop.f32.mrb[0].mxu0
    %v564 = vadd.f32 0.0, %v563
    %v565 = vpop.f32.mrb[0].mxu0
    %566 = vmatprep.mubr.bf16.mxu0 0
    %567 = vmatmul.mubr.bf16.gmra.mrb[0].mxu0 %v143
    %v568 = vpop.f32.mrb[0].mxu0
    %v569 = vadd.f32 0.0, %v568
    %v570 = vpop.f32.mrb[0].mxu0
    %v571 = vpop.f32.mrb[0].mxu0
    %v572 = vadd.f32 0.0, %v571
    %v573 = vpop.f32.mrb[0].mxu0
    %574 = vmatprep.mubr.bf16.mxu0 0
    %575 = vmatmul.mubr.bf16.gmra.mrb[0].mxu0 %v146
    %v576 = vpop.f32.mrb[0].mxu0
    %v577 = vadd.f32 0.0, %v576
    %v578 = vpop.f32.mrb[0].mxu0
    %v579 = vpop.f32.mrb[0].mxu0
    %v580 = vadd.f32 0.0, %v579
    %v581 = vpop.f32.mrb[0].mxu0
    %582 = vdwg.mxu0
    %v583 = vmax.f32 %v521, 0.0
    %v584 = vmax.f32 %v524, 0.0
    %v585 = vmax.f32 %v529, 0.0
    %v586 = vmax.f32 %v532, 0.0
    %v587 = vmax.f32 %v537, 0.0
    %v588 = vmax.f32 %v540, 0.0
    %v589 = vmax.f32 %v545, 0.0
    %v590 = vmax.f32 %v548, 0.0
    %v591 = vmax.f32 %v553, 0.0
    %v592 = vmax.f32 %v556, 0.0
    %v593 = vmax.f32 %v561, 0.0
    %v594 = vmax.f32 %v564, 0.0
    %v595 = vmax.f32 %v569, 0.0
    %v596 = vmax.f32 %v572, 0.0
    %v597 = vmax.f32 %v577, 0.0
    %v598 = vmax.f32 %v580, 0.0
    %v599 = vpack.c.bf16 %v584, %v583
    %v600 = vpack.c.bf16 %v586, %v585
    %v601 = vpack.c.bf16 %v588, %v587
    %v602 = vpack.c.bf16 %v590, %v589
    %v603 = vpack.c.bf16 %v592, %v591
    %v604 = vpack.c.bf16 %v594, %v593
    %v605 = vpack.c.bf16 %v596, %v595
    %v606 = vpack.c.bf16 %v598, %v597
    %607 = vmatprep.subr.bf16.mxu0 0
    %608 = vmatpush1.bf16.msra.mxu0 %v599
    %609 = vmatprep.subr.bf16.mxu0 0
    %610 = vmatpush1.bf16.msra.mxu0 %v600
    %611 = vmatprep.subr.bf16.mxu0 0
    %612 = vmatpush1.bf16.msra.mxu0 %v601
    %613 = vmatprep.subr.bf16.mxu0 0
    %614 = vmatpush1.bf16.msra.mxu0 %v602
    %615 = vmatprep.subr.bf16.mxu0 0
    %616 = vmatpush1.bf16.msra.mxu0 %v603
    %617 = vmatprep.subr.bf16.mxu0 0
    %618 = vmatpush1.bf16.msra.mxu0 %v604
    %619 = vmatprep.subr.bf16.mxu0 0
    %620 = vmatpush1.bf16.msra.mxu0 %v605
    %621 = vmatprep.subr.bf16.mxu0 0
    %622 = vmatpush1.bf16.msra.mxu0 %v606
    %623 = vmatprep.subr.bf16.mxu0 0
    %624 = vmatpush1.bf16.msra.mxu0 0
    %625 = vmatprep.subr.bf16.mxu0 0
    %626 = vmatpush1.bf16.msra.mxu0 0
    %627 = vmatprep.subr.bf16.mxu0 0
    %628 = vmatpush1.bf16.msra.mxu0 0
    %629 = vmatprep.subr.bf16.mxu0 0
    %630 = vmatpush1.bf16.msra.mxu0 0
    %631 = vmatprep.subr.bf16.mxu0 0
    %632 = vmatpush1.bf16.msra.mxu0 0
    %633 = vmatprep.subr.bf16.mxu0 0
    %634 = vmatpush1.bf16.msra.mxu0 0
    %635 = vmatprep.subr.bf16.mxu0 0
    %636 = vmatpush1.bf16.msra.mxu0 0
    %637 = vmatprep.subr.bf16.mxu0 0
    %638 = vmatpush1.bf16.msra.mxu0 0
    %639 = vmatprep.mubr.bf16.mxu0 0
    %640 = vmatmul.mubr.bf16.gmra.mrb[0].mxu0 %v301
    %v641 = vpop.f32.mrb[0].mxu0
    %v642 = vadd.f32 0.0, %v641
    %v643 = vpop.f32.mrb[0].mxu0
    %v644 = vpop.f32.mrb[0].mxu0
    %v645 = vadd.f32 0.0, %v644
    %v646 = vpop.f32.mrb[0].mxu0
    %647 = vmatprep.mubr.bf16.mxu0 0
    %648 = vmatmul.mubr.bf16.gmra.mrb[0].mxu0 %v302
    %v649 = vpop.f32.mrb[0].mxu0
    %v650 = vadd.f32 0.0, %v649
    %v651 = vpop.f32.mrb[0].mxu0
    %v652 = vpop.f32.mrb[0].mxu0
    %v653 = vadd.f32 0.0, %v652
    %v654 = vpop.f32.mrb[0].mxu0
    %655 = vmatprep.mubr.bf16.mxu0 0
    %656 = vmatmul.mubr.bf16.gmra.mrb[0].mxu0 %v303
    %v657 = vpop.f32.mrb[0].mxu0
    %v658 = vadd.f32 0.0, %v657
    %v659 = vpop.f32.mrb[0].mxu0
    %v660 = vpop.f32.mrb[0].mxu0
    %v661 = vadd.f32 0.0, %v660
    %v662 = vpop.f32.mrb[0].mxu0
    %663 = vmatprep.mubr.bf16.mxu0 0
    %664 = vmatmul.mubr.bf16.gmra.mrb[0].mxu0 %v304
    %v665 = vpop.f32.mrb[0].mxu0
    %v666 = vadd.f32 0.0, %v665
    %v667 = vpop.f32.mrb[0].mxu0
    %v668 = vpop.f32.mrb[0].mxu0
    %v669 = vadd.f32 0.0, %v668
    %v670 = vpop.f32.mrb[0].mxu0
    %671 = vmatprep.mubr.bf16.mxu0 0
    %672 = vmatmul.mubr.bf16.gmra.mrb[0].mxu0 %v305
    %v673 = vpop.f32.mrb[0].mxu0
    %v674 = vadd.f32 0.0, %v673
    %v675 = vpop.f32.mrb[0].mxu0
    %v676 = vpop.f32.mrb[0].mxu0
    %v677 = vadd.f32 0.0, %v676
    %v678 = vpop.f32.mrb[0].mxu0
    %679 = vmatprep.mubr.bf16.mxu0 0
    %680 = vmatmul.mubr.bf16.gmra.mrb[0].mxu0 %v306
    %v681 = vpop.f32.mrb[0].mxu0
    %v682 = vadd.f32 0.0, %v681
    %v683 = vpop.f32.mrb[0].mxu0
    %v684 = vpop.f32.mrb[0].mxu0
    %v685 = vadd.f32 0.0, %v684
    %v686 = vpop.f32.mrb[0].mxu0
    %687 = vmatprep.mubr.bf16.mxu0 0
    %688 = vmatmul.mubr.bf16.gmra.mrb[0].mxu0 %v307
    %v689 = vpop.f32.mrb[0].mxu0
    %v690 = vadd.f32 0.0, %v689
    %v691 = vpop.f32.mrb[0].mxu0
    %v692 = vpop.f32.mrb[0].mxu0
    %v693 = vadd.f32 0.0, %v692
    %v694 = vpop.f32.mrb[0].mxu0
    %695 = vmatprep.mubr.bf16.mxu0 0
    %696 = vmatmul.mubr.bf16.gmra.mrb[0].mxu0 %v308
    %v697 = vpop.f32.mrb[0].mxu0
    %v698 = vadd.f32 0.0, %v697
    %v699 = vpop.f32.mrb[0].mxu0
    %v700 = vpop.f32.mrb[0].mxu0
    %v701 = vadd.f32 0.0, %v700
    %v702 = vpop.f32.mrb[0].mxu0
    %703 = vdwg.mxu0
    %s704 = smul.addr %s466, 2
    %s705 = scalar_lea.vmem %s1, %s704
    %v706 = vld [vmem:[%s705] sm:$0x3]
    %v707 = vunpack.c.l.bf16 %v706
    %v708 = vlaneseq
    %v709 = vshrl.u32 %v708, 7
    %v710 = vsub.s32 0, %v709
    %v711 = vrot.slane %v707, %v710
    %v712 = vadd.f32 %v642, %v711
    %v713 = vadd.f32 %v645, %v711
    %v714 = vadd.f32 %v650, %v711
    %v715 = vadd.f32 %v653, %v711
    %v716 = vlaneseq
    %v717 = vshrl.u32 %v716, 7
    %v718 = vsub.s32 1, %v717
    %v719 = vrot.slane %v707, %v718
    %v720 = vadd.f32 %v658, %v719
    %v721 = vadd.f32 %v661, %v719
    %v722 = vadd.f32 %v666, %v719
    %v723 = vadd.f32 %v669, %v719
    %v724 = vmax.f32 %v712, %v720
    %v725 = vmax.f32 %v713, %v721
    %v726 = vmax.f32 %v714, %v722
    %v727 = vmax.f32 %v715, %v723
    %v728 = vlaneseq
    %v729 = vshrl.u32 %v728, 7
    %v730 = vsub.s32 2, %v729
    %v731 = vrot.slane %v707, %v730
    %v732 = vadd.f32 %v674, %v731
    %v733 = vadd.f32 %v677, %v731
    %v734 = vadd.f32 %v682, %v731
    %v735 = vadd.f32 %v685, %v731
    %v736 = vmax.f32 %v724, %v732
    %v737 = vmax.f32 %v725, %v733
    %v738 = vmax.f32 %v726, %v734
    %v739 = vmax.f32 %v727, %v735
    %v740 = vlaneseq
    %v741 = vshrl.u32 %v740, 7
    %v742 = vsub.s32 3, %v741
    %v743 = vrot.slane %v707, %v742
    %v744 = vadd.f32 %v690, %v743
    %v745 = vadd.f32 %v693, %v743
    %v746 = vadd.f32 %v698, %v743
    %v747 = vadd.f32 %v701, %v743
    %v748 = vmax.f32 %v736, %v744
    %v749 = vmax.f32 %v737, %v745
    %v750 = vmax.f32 %v738, %v746
    %v751 = vmax.f32 %v739, %v747
    %v752 = vmax.f32 %v462, %v748
    %v753 = vmax.f32 %v463, %v749
    %v754 = vmax.f32 %v464, %v750
    %v755 = vmax.f32 %v465, %v751
  $region26: #{sa_module_forward.1} parent=0 // loop_footer
    %s58 = sadd.s32 1, %s54
  $region27: #{sa_module_forward.1} parent=0 // loop_footer_branch
    %53 = sbr.rel target = $region23
  $region28: #{sa_module_forward.1} parent=0 // loop_exit
    _
  %v756 = vld [vmem:[%s4] sm:$0xff]
  %v757 = vld [vmem:[%s4 + $0x8] sm:$0xff]
  %v758 = vld [vmem:[%s4 + $0x10] sm:$0xff]
  %v759 = vld [vmem:[%s4 + $0x18] sm:$0xff]
  %761 = vset.pattern.permute.xlu0 0
  %762 = vperm.xlu0 %761, %v756
  %v763 = vpop.permute.xlu0 %762
  %766 = vset.pattern.permute.xlu0 0
  %767 = vperm.xlu0 %766, %v757
  %v768 = vpop.permute.xlu0 %767
  %771 = vset.pattern.permute.xlu0 0
  %772 = vperm.xlu0 %771, %v758
  %v773 = vpop.permute.xlu0 %772
  %776 = vset.pattern.permute.xlu0 0
  %777 = vperm.xlu0 %776, %v759
  %v778 = vpop.permute.xlu0 %777
  %v780 = vadd.f32 %v59, %v763
  %v781 = vadd.f32 %v60, %v768
  %v782 = vadd.f32 %v61, %v773
  %v783 = vadd.f32 %v62, %v778
  %v784 = vmax.f32 %v780, 0.0
  %v785 = vmax.f32 %v781, 0.0
  %v786 = vmax.f32 %v782, 0.0
  %v787 = vmax.f32 %v783, 0.0
  %788 = vst [vmem:[%s5] sm:$0xff] %v784
  %789 = vst [vmem:[%s5 + $0x8] sm:$0xff] %v785
  %790 = vst [vmem:[%s5 + $0x10] sm:$0xff] %v786
  %791 = vst [vmem:[%s5 + $0x18] sm:$0xff] %v787
  // Predicated region
  $region29: #{sa_module_forward.1} parent=0 // pred_check
    _
  $region30: #{sa_module_forward.1} parent=0 // pred_check_branch
    %793 = sbr.rel (0) target = $region32
  $region31: #{sa_module_forward.1} parent=0 // pred_region
    _
  $region32: #{sa_module_forward.1} parent=0 // pred_fallthru
    _
  // Predicated region
  $region33: #{sa_module_forward.1} parent=0 // pred_check
    _
  $region34: #{sa_module_forward.1} parent=0 // pred_check_branch
    %795 = sbr.rel (0) target = $region36
  $region35: #{sa_module_forward.1} parent=0 // pred_region
    _
  $region36: #{sa_module_forward.1} parent=0 // pred_fallthru
    _

</llo_original>
